<compile_context>
chip_gen: v6e
topology: v6e:2x2x1
jax: 0.10.0
libtpu: 0.0.40
codegen_flags: <defaults>
</compile_context>

<pallas_src>
import math
from functools import partial

import jax
import jax.numpy as jnp
from jax import lax
from jax.experimental import pallas as pl
from jax.experimental.pallas import tpu as pltpu


def _round_up(x, m):
    return (x + m - 1) // m * m


# ----------------------------- dense (Linear) kernel -------------------------

def _dense_kernel(x_ref, w_ref, b_ref, o_ref):
    o_ref[...] = (
        jnp.dot(x_ref[...], w_ref[...], preferred_element_type=jnp.float32)
        + b_ref[...]
    ).astype(o_ref.dtype)


def dense(x, w_t, b_row, out_dtype=jnp.float32, tm_max=256):
    """x: [M, K]; w_t: [K, N] bf16 (pre-transposed); b_row: [1, N] f32 -> [M, N]."""
    M, K = x.shape
    N = w_t.shape[1]
    x = x.astype(jnp.bfloat16)
    Mp = _round_up(M, 8)
    tm = min(tm_max, Mp)
    Mp = _round_up(Mp, tm)
    if Mp != M:
        x = jnp.pad(x, ((0, Mp - M), (0, 0)))
    out = pl.pallas_call(
        _dense_kernel,
        out_shape=jax.ShapeDtypeStruct((Mp, N), out_dtype),
        grid_spec=pltpu.PrefetchScalarGridSpec(
            num_scalar_prefetch=0,
            grid=(Mp // tm,),
            # TODO(synk): on v7x single-buffer the weight/bias specs
            # (pipeline_mode=pl.Buffered(1)) to halve their VMEM footprint.
            in_specs=[pl.BlockSpec((tm, K), lambda i: (i, 0)),
                      pl.BlockSpec((K, N), lambda i: (0, 0)),
                      pl.BlockSpec((1, N), lambda i: (0, 0))],
            out_specs=pl.BlockSpec((tm, N), lambda i: (i, 0))),
        compiler_params=pltpu.CompilerParams(
            dimension_semantics=("parallel",)),
    )(x, w_t, b_row)
    return out[:M] if Mp != M else out


# ----------------------------- LSTM layer kernel -----------------------------

def _lstm_layer_kernel(x_ref, wih_ref, whh_ref, b_ref, h0_ref, c0_ref,
                       hseq_ref, hT_ref, cT_ref,
                       h_sc, c_sc, xg_sc, *, seq_len, tt, batch, unroll):
    chunk = pl.program_id(0)
    hp = h0_ref.shape[1]

    @pl.when(chunk == 0)
    def _():
        h_sc[...] = h0_ref[...].astype(h_sc.dtype)
        c_sc[...] = c0_ref[...]

    # Chunk-wide input-gate projection (both biases folded in): one
    # (tt*B, Hp) @ (Hp, 4Hp) bf16 MXU matmul covering the whole time chunk.
    xg_sc[...] = (
        jnp.dot(x_ref[...], wih_ref[...], preferred_element_type=jnp.float32)
        + b_ref[...])

    def make_step(masked):
        def step(t, carry):
            row = t * batch
            if batch % 8 == 0:
                row = pl.multiple_of(row, 8)
            xg_t = xg_sc[pl.ds(row, batch), :]                  # [B, 4Hp] f32
            h = h_sc[...]                                       # bf16 MXU operand
            c = c_sc[...]                                       # f32
            # TODO(synk): weight-stationary W_hh (pltpu.matmul_push_rhs /
            # matmul_acc_lhs / matmul_pop) would avoid re-loading the (Hp, 4Hp)
            # weight into the MXU on every serial step; kept as jnp.dot for
            # portability across v5e/v6e/v7x.
            g = xg_t + jnp.dot(h, whh_ref[...],
                               preferred_element_type=jnp.float32)
            # Gate slices are lane-aligned because hp is a multiple of 128.
            i_g = jax.nn.sigmoid(g[:, 0 * hp:1 * hp])
            f_g = jax.nn.sigmoid(g[:, 1 * hp:2 * hp])
            g_g = jnp.tanh(g[:, 2 * hp:3 * hp])
            o_g = jax.nn.sigmoid(g[:, 3 * hp:4 * hp])
            c_new = f_g * c + i_g * g_g
            h_new = o_g * jnp.tanh(c_new)
            if masked:                                          # only last chunk
                keep = (chunk * tt + t) < seq_len
                c_new = jnp.where(keep, c_new, c)
                h_new = jnp.where(keep, h_new, h.astype(jnp.float32))
            h_sc[...] = h_new.astype(h_sc.dtype)
            c_sc[...] = c_new
            # Per-timestep slab store: each t owns its own (B, Hp) tile, so no
            # sublane-unaligned masked stores into a shared tile.
            hseq_ref[t] = h_new.astype(hseq_ref.dtype)
            return carry
        return step

    full = (chunk + 1) * tt <= seq_len      # only the last chunk can be partial

    @pl.when(full)
    def _():
        lax.fori_loop(0, tt, make_step(False), 0, unroll=unroll)

    @pl.when(jnp.logical_not(full))
    def _():
        lax.fori_loop(0, tt, make_step(True), 0, unroll=unroll)

    # Cheap [B, Hp] write every chunk (the last chunk's value is what lands).
    hT_ref[...] = h_sc[...].astype(hT_ref.dtype)
    cT_ref[...] = c_sc[...]


def lstm_layer(x_flat, wih_t, whh_t, bias_row, h0, c0, *, seq_len, tt, batch):
    """x_flat: [Tp*B, Hp] bf16 (time-major flattened); wih_t/whh_t: [Hp, 4Hp] bf16;
       bias_row: [1, 4Hp] f32; h0/c0: [B, Hp] f32.
       Returns (hseq [Tp, B, Hp] bf16, h_T [B, Hp] f32, c_T [B, Hp] f32)."""
    TB, Hp = x_flat.shape
    Tp = TB // batch
    G = 4 * Hp
    nc = Tp // tt
    unroll = max(1, min(8, tt))
    kernel = partial(_lstm_layer_kernel, seq_len=seq_len, tt=tt, batch=batch,
                     unroll=unroll)

    flops = int(4 * Tp * batch * Hp * G)        # ih + hh matmuls (2 flops / MAC)
    trans = int(5 * Tp * batch * Hp)            # 3 sigmoid + 2 tanh per (b, h)
    bytes_acc = int(2 * TB * Hp * 2 + 2 * Hp * G * 2 + G * 4 + 4 * batch * Hp * 4)

    # VMEM budget derived from the actual tiles (pipelined blocks double-buffered,
    # scratch single) + margin, clamped so it is also valid on v7x's 64 MiB VMEM.
    sub = lambda r: _round_up(max(r, 8), 8)
    blk_x = tt * batch * Hp * 2
    blk_w = Hp * G * 2
    blk_b = 8 * G * 4
    blk_hc = sub(batch) * Hp * 4
    blk_hseq = tt * sub(batch) * Hp * 2
    scratch = sub(batch) * Hp * (2 + 4) + tt * batch * G * 4
    vmem_need = 2 * (blk_x + 2 * blk_w + blk_b + 2 * blk_hc + blk_hseq + 2 * blk_hc)
    vmem_need += scratch
    vmem_limit = int(min(max(vmem_need + (4 << 20), 16 << 20), 64 << 20))

    # TODO(synk): on v7x add a "parallel" batch-block grid axis (or pl.core_map
    # over pltpu.create_tensorcore_mesh) so the 2nd TensorCore runs half the
    # batch; degenerate at the demo batch size so omitted here.
    return pl.pallas_call(
        kernel,
        out_shape=(jax.ShapeDtypeStruct((Tp, batch, Hp), jnp.bfloat16),
                   jax.ShapeDtypeStruct((batch, Hp), jnp.float32),
                   jax.ShapeDtypeStruct((batch, Hp), jnp.float32)),
        grid_spec=pltpu.PrefetchScalarGridSpec(
            num_scalar_prefetch=0,
            grid=(nc,),
            in_specs=[pl.BlockSpec((tt * batch, Hp), lambda c: (c, 0)),
                      # TODO(synk): on v7x, single-buffer these grid-invariant
                      # operands (pipeline_mode=pl.Buffered(1)) to halve their copy.
                      pl.BlockSpec((Hp, G), lambda c: (0, 0)),
                      pl.BlockSpec((Hp, G), lambda c: (0, 0)),
                      pl.BlockSpec((1, G), lambda c: (0, 0)),
                      pl.BlockSpec((batch, Hp), lambda c: (0, 0)),
                      pl.BlockSpec((batch, Hp), lambda c: (0, 0))],
            out_specs=(pl.BlockSpec((tt, batch, Hp), lambda c: (c, 0, 0)),
                       pl.BlockSpec((batch, Hp), lambda c: (0, 0)),
                       pl.BlockSpec((batch, Hp), lambda c: (0, 0))),
            scratch_shapes=[pltpu.VMEM((batch, Hp), jnp.bfloat16),   # h state
                            pltpu.VMEM((batch, Hp), jnp.float32),    # c state
                            pltpu.VMEM((tt * batch, G), jnp.float32)]),  # xg
        compiler_params=pltpu.CompilerParams(
            dimension_semantics=("arbitrary",),
            vmem_limit_bytes=vmem_limit),
        cost_estimate=pl.CostEstimate(flops=flops, transcendentals=trans,
                                      bytes_accessed=bytes_acc),
    )(x_flat, wih_t, whh_t, bias_row, h0, c0)


# ----------------------------- parameter preparation -------------------------

def prepare_params(params):
    """One-time: pad hidden to a multiple of 128, transpose, fuse biases, cast to
    bf16 for MXU operands.  Zero padding keeps padded h/c lanes exactly zero."""
    H = params["n_embd"]
    L = params["n_layers"]
    Hp = _round_up(H, 128)
    in_w = params["in_w"].astype(jnp.float32)          # [H, Din]
    Din = in_w.shape[1]
    out_w = params["out_w"].astype(jnp.float32)        # [Dout, H]
    Dout = out_w.shape[0]
    Doutp = _round_up(Dout, 128)

    in_w_t = jnp.zeros((Din, Hp), jnp.float32).at[:, :H].set(in_w.T)
    in_b = jnp.zeros((1, Hp), jnp.float32).at[0, :H].set(
        params["in_b"].astype(jnp.float32))

    def pad_gate_w(w):
        # w: [4H, H] (i,f,g,o stacked) -> [Hp, 4Hp] bf16, each gate block starting
        # on a 128-lane boundary; padded rows/cols are zero (keeps padded lanes 0).
        fan_in = w.shape[1]
        out = jnp.zeros((4 * Hp, Hp), jnp.float32)
        for k in range(4):
            out = out.at[k * Hp:k * Hp + H, :fan_in].set(w[k * H:(k + 1) * H, :])
        return out.T.astype(jnp.bfloat16)

    def pad_gate_b(b):
        out = jnp.zeros((4 * Hp,), jnp.float32)
        for k in range(4):
            out = out.at[k * Hp:k * Hp + H].set(b[k * H:(k + 1) * H])
        return out.reshape(1, 4 * Hp)

    layers = []
    for lp in params["lstm"]:
        layers.append({
            "wih_t": pad_gate_w(lp["w_ih"].astype(jnp.float32)),
            "whh_t": pad_gate_w(lp["w_hh"].astype(jnp.float32)),
            "bias": pad_gate_b((lp["b_ih"] + lp["b_hh"]).astype(jnp.float32)),
        })

    out_w_t = jnp.zeros((Hp, Doutp), jnp.float32).at[:H, :Dout].set(out_w.T)
    out_b = jnp.zeros((1, Doutp), jnp.float32).at[0, :Dout].set(
        params["out_b"].astype(jnp.float32))

    return {"H": H, "Hp": Hp, "L": L, "Din": Din, "Dout": Dout, "Doutp": Doutp,
            "in_w_t": in_w_t.astype(jnp.bfloat16), "in_b": in_b,
            "layers": layers,
            "out_w_t": out_w_t.astype(jnp.bfloat16), "out_b": out_b}


# ----------------------------- full forward ----------------------------------

def classical_lstm_forward(prepared, inputs, hidden_state=None, rows_target=256):
    """inputs: [B, T, input_dim].  Returns (predictions [B,T,Dout], (h_n, c_n))
    with h_n/c_n of shape [n_layers, B, n_embd] (PyTorch LSTM convention)."""
    B, T, Din = inputs.shape
    H, Hp, L = prepared["H"], prepared["Hp"], prepared["L"]
    Dout, Doutp = prepared["Dout"], prepared["Doutp"]

    # Time-chunk selection: fill the MXU row dimension (target tt*B rows) while
    # keeping the f32 gate-preactivation scratch within budget and minimizing
    # padded timesteps.  tt*B is always a multiple of 8.
    step = 8 // math.gcd(B, 8)
    per_t_bytes = B * 4 * Hp * 4
    xg_budget = 8 << 20
    tt_cap = max(step, (xg_budget // per_t_bytes) // step * step)
    tt_target = _round_up(max(1, rows_target // B), step)
    tt = max(step, min(tt_target, tt_cap, _round_up(T, step)))
    Tp = _round_up(T, tt)

    # Input projection on the tiny Din-wide time-major input (no Hp-wide
    # transpose anywhere on the activation path).
    x_tm = inputs.astype(jnp.float32).transpose(1, 0, 2).reshape(T * B, Din)
    xe = dense(x_tm, prepared["in_w_t"], prepared["in_b"],
               out_dtype=jnp.bfloat16)                         # [T*B, Hp]
    if Tp != T:
        xe = jnp.pad(xe, ((0, (Tp - T) * B), (0, 0)))
    layer_in = xe                                              # [Tp*B, Hp]

    if hidden_state is None:
        h0 = jnp.zeros((L, B, Hp), jnp.float32)
        c0 = jnp.zeros((L, B, Hp), jnp.float32)
    else:
        h0_in, c0_in = hidden_state
        h0 = jnp.zeros((L, B, Hp), jnp.float32).at[:, :, :H].set(
            h0_in.astype(jnp.float32))
        c0 = jnp.zeros((L, B, Hp), jnp.float32).at[:, :, :H].set(
            c0_in.astype(jnp.float32))

    h_fin, c_fin = [], []
    for l in range(L):
        lp = prepared["layers"][l]
        hseq, hT, cT = lstm_layer(layer_in, lp["wih_t"], lp["whh_t"], lp["bias"],
                                  h0[l], c0[l], seq_len=T, tt=tt, batch=B)
        layer_in = hseq.reshape(Tp * B, Hp)    # contiguous collapse: free
        h_fin.append(hT)
        c_fin.append(cT)
        # TODO(synk): nn.LSTM inter-layer dropout (p=config.dropout) is
        # training-mode only; this implements the eval/inference forward.
        # TODO(synk): fuse the L layers into one pallas_call with the inter-layer
        # sequence ping-ponged in VMEM scratch when 2*Tp*B*Hp*2 bytes fit VMEM.

    # Output projection directly on the time-major flat sequence; only the tiny
    # [T, B, Dout] result is transposed back to batch-major.
    out_flat = dense(layer_in[:T * B], prepared["out_w_t"], prepared["out_b"],
                     out_dtype=jnp.float32)                    # [T*B, Doutp]
    preds = out_flat.reshape(T, B, Doutp).transpose(1, 0, 2)[:, :, :Dout]

    h_n = jnp.stack(h_fin)[:, :, :H]
    c_n = jnp.stack(c_fin)[:, :, :H]
    return preds, (h_n, c_n)


# ----------------------------- pure-JAX reference ----------------------------

def ref_forward(params, inputs, hidden_state=None):
    B, T, _ = inputs.shape
    H = params["n_embd"]
    L = params["n_layers"]
    x = inputs.astype(jnp.float32)
    xe = x @ params["in_w"].T + params["in_b"]
    if hidden_state is None:
        hs = [jnp.zeros((B, H), jnp.float32) for _ in range(L)]
        cs = [jnp.zeros((B, H), jnp.float32) for _ in range(L)]
    else:
        hs = [hidden_state[0][l] for l in range(L)]
        cs = [hidden_state[1][l] for l in range(L)]
    layer_in = xe
    for l in range(L):
        lp = params["lstm"][l]
        b = lp["b_ih"] + lp["b_hh"]
        ht, ct, outs = hs[l], cs[l], []
        for t in range(T):
            g = layer_in[:, t] @ lp["w_ih"].T + b + ht @ lp["w_hh"].T
            i = jax.nn.sigmoid(g[:, :H])
            f = jax.nn.sigmoid(g[:, H:2 * H])
            gg = jnp.tanh(g[:, 2 * H:3 * H])
            o = jax.nn.sigmoid(g[:, 3 * H:])
            ct = f * ct + i * gg
            ht = o * jnp.tanh(ct)
            outs.append(ht)
        layer_in = jnp.stack(outs, axis=1)
        hs[l], cs[l] = ht, ct
    preds = layer_in @ params["out_w"].T + params["out_b"]
    return preds, (jnp.stack(hs), jnp.stack(cs))


# ----------------------------- param init ------------------------------------

def init_params(key, input_dim, output_dim, n_embd, n_layers):
    params = {"n_embd": n_embd, "n_layers": n_layers}
    keys = jax.random.split(key, 4 + 4 * n_layers)
    kidx = 0

    def u(k, shape, fan):
        bound = 1.0 / jnp.sqrt(fan)
        return jax.random.uniform(k, shape, jnp.float32, -bound, bound)

    params["in_w"] = u(keys[kidx], (n_embd, input_dim), input_dim); kidx += 1
    params["in_b"] = u(keys[kidx], (n_embd,), input_dim); kidx += 1
    params["lstm"] = []
    for _ in range(n_layers):
        layer = {
            "w_ih": u(keys[kidx + 0], (4 * n_embd, n_embd), n_embd),
            "w_hh": u(keys[kidx + 1], (4 * n_embd, n_embd), n_embd),
            "b_ih": u(keys[kidx + 2], (4 * n_embd,), n_embd),
            "b_hh": u(keys[kidx + 3], (4 * n_embd,), n_embd),
        }
        kidx += 4
        params["lstm"].append(layer)
    params["out_w"] = u(keys[kidx], (output_dim, n_embd), n_embd); kidx += 1
    params["out_b"] = u(keys[kidx], (output_dim,), n_embd); kidx += 1
    return params


# ----------------------------- main -------------------------------------------

if __name__ == "__main__":
    key = jax.random.PRNGKey(0)
    kp, kx = jax.random.split(key)

    # Small config consistent with the module: LSTMConfig(input_dim=10, output_dim=4,
    # n_embd=32, n_layers=2, dropout=0.1); batch=2, seq=8.
    B, T = 2, 8
    input_dim, output_dim, n_embd, n_layers = 10, 4, 32, 2

    params = init_params(kp, input_dim, output_dim, n_embd, n_layers)
    prepared = prepare_params(params)
    inputs = jax.random.normal(kx, (B, T, input_dim), jnp.float32)

    preds, (h_n, c_n) = classical_lstm_forward(prepared, inputs, hidden_state=None)
    preds = jax.block_until_ready(preds)
    h_n = jax.block_until_ready(h_n)
    c_n = jax.block_until_ready(c_n)

    # Correctness check against pure-JAX f32 reference.  Kernel matmuls run in bf16
    # with f32 accumulation (and h state in bf16), so tolerance is loosened.
    rpreds, (rh, rc) = ref_forward(params, inputs, hidden_state=None)
    assert preds.shape == (B, T, output_dim)
    assert h_n.shape == (n_layers, B, n_embd) and c_n.shape == (n_layers, B, n_embd)
    assert jnp.allclose(preds, rpreds, atol=5e-2, rtol=5e-2)
    assert jnp.allclose(h_n, rh, atol=5e-2, rtol=5e-2)
    assert jnp.allclose(c_n, rc, atol=5e-2, rtol=5e-2)

    print("KERNEL_OK")
</pallas_src>

<mosaic_0001>
module attributes {stable_mosaic.version = 11 : i64} {
  func.func @_dense_kernel(%arg0: i32, %arg1: memref<16x10xbf16, #tpu.memory_space<vmem>>, %arg2: memref<10x128xbf16, #tpu.memory_space<vmem>>, %arg3: memref<1x128xf32, #tpu.memory_space<vmem>>, %arg4: memref<16x128xbf16, #tpu.memory_space<vmem>>) attributes {dimension_semantics = [#tpu.dimension_semantics<parallel>], iteration_bounds = array<i64: 1>, scalar_prefetch = 0 : i64, scratch_operands = 0 : i64, tpu.core_type = #tpu.core_type<tc>, window_params = [{transform_indices = @transform_0, window_bounds = array<i64: 16, 10>}, {pipeline_mode = #tpu.pipeline_mode<synchronous>, transform_indices = @transform_1, window_bounds = array<i64: 10, 128>}, {pipeline_mode = #tpu.pipeline_mode<synchronous>, transform_indices = @transform_2, window_bounds = array<i64: 1, 128>}, {transform_indices = @transform_3, window_bounds = array<i64: 16, 128>}]} {
    %c0 = arith.constant 0 : index
    %c0_0 = arith.constant 0 : index
    %0 = vector.load %arg1[%c0, %c0_0] : memref<16x10xbf16, #tpu.memory_space<vmem>>, vector<16x10xbf16>
    %c0_1 = arith.constant 0 : index
    %c0_2 = arith.constant 0 : index
    %1 = vector.load %arg2[%c0_1, %c0_2] : memref<10x128xbf16, #tpu.memory_space<vmem>>, vector<10x128xbf16>
    %cst = arith.constant dense<0.000000e+00> : vector<16x128xf32>
    %2 = tpu.matmul %0, %1, %cst {dimension_numbers = #tpu.dot_dimension_numbers<[1], [0], [0], [1], [0, 0, 1, 1], [], []>} : vector<16x10xbf16>, vector<10x128xbf16>, vector<16x128xf32> -> vector<16x128xf32>
    %c0_3 = arith.constant 0 : index
    %c0_4 = arith.constant 0 : index
    %3 = vector.load %arg3[%c0_3, %c0_4] : memref<1x128xf32, #tpu.memory_space<vmem>>, vector<1x128xf32>
    %4 = vector.broadcast %3 : vector<1x128xf32> to vector<16x128xf32>
    %5 = arith.addf %2, %4 : vector<16x128xf32>
    %6 = arith.truncf %5 : vector<16x128xf32> to vector<16x128xbf16>
    %c0_5 = arith.constant 0 : index
    %c0_6 = arith.constant 0 : index
    %7 = vector.load %arg4[%c0_5, %c0_6] : memref<16x128xbf16, #tpu.memory_space<vmem>>, vector<16x128xbf16>
    tpu.vector_store %arg4[%c0_5, %c0_6], %6 {strides = array<i32>} : memref<16x128xbf16, #tpu.memory_space<vmem>>, vector<16x128xbf16>,
    return
  }
  func.func @transform_0(%arg0: i32) -> (i32, i32) {
    %c0_i32 = arith.constant 0 : i32
    %c0_i32_0 = arith.constant 0 : i32
    return %arg0, %c0_i32 : i32, i32
  }
  func.func @transform_1(%arg0: i32) -> (i32, i32) {
    %c0_i32 = arith.constant 0 : i32
    %c0_i32_0 = arith.constant 0 : i32
    %c0_i32_1 = arith.constant 0 : i32
    return %c0_i32, %c0_i32_0 : i32, i32
  }
  func.func @transform_2(%arg0: i32) -> (i32, i32) {
    %c0_i32 = arith.constant 0 : i32
    %c0_i32_0 = arith.constant 0 : i32
    %c0_i32_1 = arith.constant 0 : i32
    return %c0_i32, %c0_i32_0 : i32, i32
  }
  func.func @transform_3(%arg0: i32) -> (i32, i32) {
    %c0_i32 = arith.constant 0 : i32
    %c0_i32_0 = arith.constant 0 : i32
    return %arg0, %c0_i32 : i32, i32
  }
}

</mosaic_0001>

<llo_original>
// kernel: tpu_custom_call.1
$region0: #{tpu_custom_call.1}
  #allocation0 [shape = 'u32[]', space=smem, size = 0x4, offset = 0x4, fixed_abs, tag = 'smem constant byte address 0x4 - core index']
  #allocation1 [shape = 'u32[144,128]{1,0:T(1,128)}', space=vmem, size = 0x12000, scoped, tag = 'internal scratch']
  %s0 = inlined_call_operand.hbm [shape: bf16[16,10], index: 0, kind: input, shape index: {}]
  %s1 = inlined_call_operand.hbm [shape: bf16[10,128], index: 1, kind: input, shape index: {}]
  %s2 = inlined_call_operand.vmem [shape: f32[1,128], index: 2, kind: input, shape index: {}]
  %s3 = inlined_call_operand.hbm [shape: bf16[16,128], index: 3, kind: output, shape index: {}]
  %s4 = sld [smem:[#allocation0]]
  $region30: #{tpu_custom_call.1} parent=0
    _
  %s6 = ssub.s32 1, %s4
  %s7 = scalar_select 0, %s6, %s4
  $region1: #{tpu_custom_call.1} parent=0
    #allocation2 [shape = 'u8[4096]{0}', space=vmem, size = 0x1000, scoped, tag = 'input window, operand 0, single buffered']
    #allocation3 [shape = 's32[1]{0}', space=sflag, size = 0x4, scoped, tag = 'scoped memory for tpu_custom_call.1']
    #allocation4 [shape = 's32[1]{0}', space=sflag, size = 0x4, scoped, tag = 'scoped memory for tpu_custom_call.1']
    #allocation5 [shape = 'u8[4096]{0}', space=vmem, size = 0x1000, scoped, tag = 'input window, operand 1, single buffered']
    #allocation6 [shape = 's32[1]{0}', space=sflag, size = 0x4, scoped, tag = 'scoped memory for tpu_custom_call.1']
    #allocation7 [shape = 'u8[4096]{0}', space=vmem, size = 0x1000, scoped, tag = 'output window, operand 0, single buffered']
    %8 = vsyncpa [#allocation3], 0
    %9 = vsyncpa [#allocation6], 0
    %10 = vsyncpa [#allocation4], 0
    // Predicated region
    $region2: #{tpu_custom_call.1} parent=1 // pred_check
      _
    $region3: #{tpu_custom_call.1} parent=1 // pred_check_branch
      %12 = sbr.rel (0) target = $region5
    $region4: #{tpu_custom_call.1} parent=1 // pred_region
      %s14 = ssub.s32 128, 128
      %15 = vsyncadd [#allocation3], %s14
      %s16 = sshll.u32 [#allocation2], 4
      %s17 = int_to_ptr.vmem [resolvable:$true] %s16
      %22 = dma.hbm_to_vmem [thread:$0]  %s0, 128, %s17, [#allocation3], 64, 64, 4
    $region5: #{tpu_custom_call.1} parent=1 // pred_fallthru
      _
    // Predicated region
    $region6: #{tpu_custom_call.1} parent=1 // pred_check
      _
    $region7: #{tpu_custom_call.1} parent=1 // pred_check_branch
      %24 = sbr.rel (0) target = $region9
    $region8: #{tpu_custom_call.1} parent=1 // pred_region
      %s26 = ssub.s32 128, 128
      %27 = vsyncadd [#allocation6], %s26
      %s28 = sshll.u32 [#allocation5], 4
      %s29 = int_to_ptr.vmem [resolvable:$true] %s28
      %34 = dma.hbm_to_vmem [thread:$0]  %s1, 128, %s29, [#allocation6], 64, 64, 4
    $region9: #{tpu_custom_call.1} parent=1 // pred_fallthru
      _
    // Predicated region
    $region10: #{tpu_custom_call.1} parent=1 // pred_check
      _
    $region11: #{tpu_custom_call.1} parent=1 // pred_check_branch
      %36 = sbr.rel (0) target = $region13
    $region12: #{tpu_custom_call.1} parent=1 // pred_region
      _
    $region13: #{tpu_custom_call.1} parent=1 // pred_fallthru
      _
    // Predicated region
    $region14: #{tpu_custom_call.1} parent=1 // pred_check
      _
    $region15: #{tpu_custom_call.1} parent=1 // pred_check_branch
      %38 = sbr.rel (0) target = $region17
    $region16: #{tpu_custom_call.1} parent=1 // pred_region
      %39 = dma.done [#allocation3], 128
    $region17: #{tpu_custom_call.1} parent=1 // pred_fallthru
      _
    // Predicated region
    $region18: #{tpu_custom_call.1} parent=1 // pred_check
      _
    $region19: #{tpu_custom_call.1} parent=1 // pred_check_branch
      %41 = sbr.rel (0) target = $region21
    $region20: #{tpu_custom_call.1} parent=1 // pred_region
      %42 = dma.done [#allocation6], 128
    $region21: #{tpu_custom_call.1} parent=1 // pred_fallthru
      _
    %v44 = vld [vmem:[#allocation2] sm:$0xf]
    %v45 = vld [vmem:[#allocation2 + $0x4] sm:$0xf]
    %v46 = vld [vmem:[#allocation5] sm:$0xf]
    %v47 = vld [vmem:[#allocation5 + $0x4] sm:$0x1]
    %v48 = vld [vmem:[%s2] sm:$0x1]
    %v50 = vlaneseq
    %v51 = vshrl.u32 %v50, 7
    %v52 = vsub.s32 0, %v51
    %v53 = vrot.slane %v48, %v52
    %v57 = vunpack.c.l.b16 %v44
    %v58 = vunpack.c.l.b16 %v45
    %v59 = vpack.c.b16 %v58, %v57
    %v62 = vunpack.c.l.b16 %v46
    %v63 = vunpack.c.l.b16 %v47
    %v64 = vpack.c.b16 %v63, %v62
    %vm65 = vcmask 80896
    %v67 = vsel %vm65, %v59, 0
    %vm69 = vcmask 1044480
    %v71 = vsel %vm69, %v64, 0
    %73 = vmatprep.subr.bf16.mxu0 0
    %74 = vmatpush1.bf16.msra.mxu0 0
    %75 = vmatprep.subr.bf16.mxu0 0
    %76 = vmatpush1.bf16.msra.mxu0 0
    %77 = vmatprep.subr.bf16.mxu0 0
    %78 = vmatpush1.bf16.msra.mxu0 0
    %79 = vmatprep.subr.bf16.mxu0 0
    %80 = vmatpush1.bf16.msra.mxu0 0
    %81 = vmatprep.subr.bf16.mxu0 0
    %82 = vmatpush1.bf16.msra.mxu0 0
    %83 = vmatprep.subr.bf16.mxu0 0
    %84 = vmatpush1.bf16.msra.mxu0 0
    %85 = vmatprep.subr.bf16.mxu0 0
    %86 = vmatpush1.bf16.msra.mxu0 0
    %87 = vmatprep.subr.bf16.mxu0 0
    %88 = vmatpush1.bf16.msra.mxu0 %v71
    %89 = vmatprep.subr.bf16.mxu0 0
    %90 = vmatpush2.bf16.msra.mxu0 0
    %91 = vmatprep.subr.bf16.mxu0 0
    %92 = vmatpush2.bf16.msra.mxu0 0
    %93 = vmatprep.subr.bf16.mxu0 0
    %94 = vmatpush2.bf16.msra.mxu0 0
    %95 = vmatprep.subr.bf16.mxu0 0
    %96 = vmatpush2.bf16.msra.mxu0 0
    %97 = vmatprep.subr.bf16.mxu0 0
    %98 = vmatpush2.bf16.msra.mxu0 0
    %99 = vmatprep.subr.bf16.mxu0 0
    %100 = vmatpush2.bf16.msra.mxu0 0
    %101 = vmatprep.subr.bf16.mxu0 0
    %102 = vmatpush2.bf16.msra.mxu0 0
    %103 = vmatprep.subr.bf16.mxu0 0
    %104 = vmatpush2.bf16.msra.mxu0 0
    %105 = vmatprep.mubr.bf16.mxu0 0
    %106 = vmatmul.mubr.bf16.gmra.mxu0 %v67
    %v107 = vpop.f32.mrf.mxu0
    %v108 = vadd.f32 %v53, %v107
    %v109 = vpop.f32.mrf.mxu0
    %v110 = vpop.f32.mrf.mxu0
    %v111 = vadd.f32 %v53, %v110
    %v112 = vpop.f32.mrf.mxu0
    %113 = vdwg.mxu0
    %v114 = vpack.c.bf16 %v111, %v108
    %v116 = vunpack.c.l.b16 %v114
    %v117 = vunpack.c.h.b16 %v114
    %v118 = vpack.c.b16 %v116, %v116
    %v119 = vpack.c.b16 %v117, %v117
    %122 = vst [vmem:[#allocation7] sm:$0xf] %v118
    %123 = vst [vmem:[#allocation7 + $0x4] sm:$0xf] %v119
    // Predicated region
    $region22: #{tpu_custom_call.1} parent=1 // pred_check
      _
    $region23: #{tpu_custom_call.1} parent=1 // pred_check_branch
      %125 = sbr.rel (0) target = $region25
    $region24: #{tpu_custom_call.1} parent=1 // pred_region
      %s127 = ssub.s32 128, 128
      %128 = vsyncadd [#allocation4], %s127
      %s129 = sshll.u32 [#allocation7], 4
      %s130 = int_to_ptr.vmem [resolvable:$true] %s129
      %135 = dma.vmem_to_hbm [thread:$0]  %s130, 128, %s3, [#allocation4], 64, 64, 4
    $region25: #{tpu_custom_call.1} parent=1 // pred_fallthru
      _
    // Predicated region
    $region26: #{tpu_custom_call.1} parent=1 // pred_check
      _
    $region27: #{tpu_custom_call.1} parent=1 // pred_check_branch
      %137 = sbr.rel (0) target = $region29
    $region28: #{tpu_custom_call.1} parent=1 // pred_region
      %138 = dma.done [#allocation4], 128
    $region29: #{tpu_custom_call.1} parent=1 // pred_fallthru
      _
    %139 = vsyncpa [#allocation3], 1
    %140 = vsyncpa [#allocation6], 1
    %141 = vsyncpa [#allocation4], 1

</llo_original>
